<compile_context>
chip_gen: v7x
topology: tpu7x:2x2x1
jax: 0.10.0
libtpu: 0.0.40
codegen_flags: <defaults>
</compile_context>

<pallas_src>
import functools
import math

import jax
import jax.numpy as jnp
from jax.experimental import pallas as pl
from jax.experimental.pallas import tpu as pltpu


def _lcm(a, b):
    return a * b // math.gcd(a, b)


def _group_norm_kernel(x_ref, w_ref, b_ref, o_ref, *, eps, inv_count):
    # x_ref/o_ref: (TR, L)  -- TR rows, each row is one (sample, group); L = Cg*HW
    # w_ref/b_ref: (TR, L)  -- per-row gamma/beta (channel value replicated over HW)
    x = x_ref[...].astype(jnp.float32)

    # Single-pass statistics: one sweep over x, no materialized (x - mean)
    # temporary feeding a second reduction.  inv_count is a static float.
    s1 = jnp.sum(x, axis=-1, keepdims=True)            # (TR, 1)
    s2 = jnp.sum(x * x, axis=-1, keepdims=True)        # (TR, 1)
    mean = s1 * inv_count
    var = jnp.maximum(s2 * inv_count - mean * mean, 0.0)
    rstd = jax.lax.rsqrt(var + eps)                     # EUP slot, per-row scalar

    # (x - mean) * rstd is a row-broadcast; affine is a lane-wise mul/add.
    xn = (x - mean) * rstd
    o_ref[...] = (xn * w_ref[...] + b_ref[...]).astype(o_ref.dtype)


def _vmem_capacity_bytes():
    """Physical VMEM of the current TPU generation (conservative fallback)."""
    try:
        info = pltpu.get_tpu_info()
        cap = getattr(info, "vmem_capacity_bytes", None)
        if cap:
            return int(cap)
    except Exception:
        pass
    return 64 << 20  # v7x per-TensorCore VMEM (smallest of v5e/v6e/v7x)


def _pick_block_rows(num_rows, L, G, in_itemsize, vmem_phys):
    """Rows per block (multiple of lcm(8, G), or == num_rows) and a vmem limit.

    Budget per (row x L) element: 2x double-buffered input + 2x double-buffered
    output (input dtype) + gamma/beta blocks (f32, 2 buffers each) + ~3 f32
    in-kernel temporaries.
    """
    step = _lcm(8, G)
    per_row_bytes = L * (2 * in_itemsize + 2 * in_itemsize + 4 * 4 + 3 * 4)
    budget = (vmem_phys * 3) // 4                          # leave compiler headroom
    # Useful-input-block cap: past ~8 MiB the fixed ~0.35us/step overhead is
    # already <5% of DMA time, even at v7x's ~3.2 TB/s HBM.
    blk_cap_bytes = min(8 << 20, max(2 << 20, budget // 8))
    rows_by_budget = max(1, budget // per_row_bytes)
    rows_by_blkcap = max(1, blk_cap_bytes // (L * in_itemsize))

    tr = min(num_rows, rows_by_budget, rows_by_blkcap)
    if tr >= num_rows:
        tr = num_rows
        if num_rows >= 2 * step:
            # Keep >= 2 grid programs so both v7x TensorCores get work.
            half = -(-num_rows // 2)
            tr = min(num_rows, step * (-(-half // step)))
    else:
        tr = max(step, (tr // step) * step)
    tr = min(tr, num_rows)

    resident = tr * per_row_bytes + (1 << 20)
    vmem_limit = int(min(max(resident, 32 << 20), (vmem_phys * 9) // 10))
    return tr, vmem_limit


def group_norm(x, weight=None, bias=None, *, num_groups=2, eps=1e-5):
    """GroupNorm forward.  x: (N, C, *) float; weight/bias: (C,) or None."""
    N, C = x.shape[0], x.shape[1]
    spatial = x.shape[2:]
    HW = 1
    for s in spatial:
        HW *= s
    G = num_groups
    assert C % G == 0, "num_channels must be divisible by num_groups"
    Cg = C // G
    L = Cg * HW           # one (sample, group) slab, flattened onto the lane axis
    NG = N * G            # number of independent normalization rows

    if weight is None:
        weight = jnp.ones((C,), dtype=jnp.float32)
    if bias is None:
        bias = jnp.zeros((C,), dtype=jnp.float32)

    # Contiguous view: row r = (sample r // G, group r % G).
    x2 = x.reshape(NG, L)
    in_itemsize = jnp.dtype(x.dtype).itemsize

    tr, vmem_limit = _pick_block_rows(NG, L, G, in_itemsize, _vmem_capacity_bytes())
    assert tr % G == 0  # every block starts at a row that is a multiple of G

    # Per-row gamma/beta: channel value replicated over HW, then tiled so the
    # block's row-local group pattern (row % G) lines up for every block.
    w_rows = jnp.broadcast_to(
        weight.reshape(G, Cg, 1).astype(jnp.float32), (G, Cg, HW)).reshape(G, L)
    b_rows = jnp.broadcast_to(
        bias.reshape(G, Cg, 1).astype(jnp.float32), (G, Cg, HW)).reshape(G, L)
    reps = tr // G
    w_tiled = jnp.tile(w_rows, (reps, 1))                  # (tr, L), small
    b_tiled = jnp.tile(b_rows, (reps, 1))                  # (tr, L), small

    grid = (pl.cdiv(NG, tr),)
    inv_count = 1.0 / float(L)

    out = pl.pallas_call(
        functools.partial(_group_norm_kernel, eps=float(eps), inv_count=inv_count),
        out_shape=jax.ShapeDtypeStruct((NG, L), x.dtype),
        grid_spec=pltpu.PrefetchScalarGridSpec(
            num_scalar_prefetch=0,
            grid=grid,
            in_specs=[
                # tr rows of (sample, group) data per step; L is the full lane axis.
                pl.BlockSpec((tr, L), lambda i: (i, 0)),
                # gamma/beta: constant block index -> fetched once, stays resident.
                pl.BlockSpec((tr, L), lambda i: (0, 0)),
                pl.BlockSpec((tr, L), lambda i: (0, 0)),
            ],
            out_specs=pl.BlockSpec((tr, L), lambda i: (i, 0)),
        ),
        compiler_params=pltpu.CompilerParams(
            dimension_semantics=("parallel",),   # every row chunk is independent
            vmem_limit_bytes=vmem_limit,
        ),
    )(x2, w_tiled, b_tiled)

    return out.reshape(x.shape)


if __name__ == "__main__":
    key = jax.random.PRNGKey(0)
    N, C, H, W = 2, 4, 16, 16
    G = 2
    eps = 1e-5

    kx, kw, kb = jax.random.split(key, 3)
    x = jax.random.normal(kx, (N, C, H, W), dtype=jnp.float32)
    # Non-trivial affine parameters to exercise the gamma/beta path
    # (module default init is ones/zeros; semantics identical).
    weight = 1.0 + 0.1 * jax.random.normal(kw, (C,), dtype=jnp.float32)
    bias = 0.1 * jax.random.normal(kb, (C,), dtype=jnp.float32)

    y = group_norm(x, weight, bias, num_groups=G, eps=eps)
    y = jax.block_until_ready(y)

    # Reference: plain-JAX group norm (biased variance), same as F.group_norm.
    xg = x.reshape(N, G, -1)
    mean = xg.mean(axis=2, keepdims=True)
    var = jnp.mean((xg - mean) ** 2, axis=2, keepdims=True)
    xn = ((xg - mean) / jnp.sqrt(var + eps)).reshape(N, C, H, W)
    ref = xn * weight.reshape(1, C, 1, 1) + bias.reshape(1, C, 1, 1)

    assert y.shape == (N, C, H, W)
    err = float(jnp.max(jnp.abs(y - ref)))
    assert jnp.allclose(y, ref, atol=2e-5, rtol=2e-5), err

    print("KERNEL_OK")
</pallas_src>

<mosaic_0001>
module attributes {stable_mosaic.version = 11 : i64} {
  func.func @_group_norm_kernel(%arg0: i32, %arg1: memref<4x512xf32, #tpu.memory_space<vmem>>, %arg2: memref<4x512xf32, #tpu.memory_space<vmem>>, %arg3: memref<4x512xf32, #tpu.memory_space<vmem>>, %arg4: memref<4x512xf32, #tpu.memory_space<vmem>>) attributes {dimension_semantics = [#tpu.dimension_semantics<parallel>], iteration_bounds = array<i64: 1>, scalar_prefetch = 0 : i64, scratch_operands = 0 : i64, tpu.core_type = #tpu.core_type<tc>, window_params = [{transform_indices = @transform_0, window_bounds = array<i64: 4, 512>}, {pipeline_mode = #tpu.pipeline_mode<synchronous>, transform_indices = @transform_1, window_bounds = array<i64: 4, 512>}, {pipeline_mode = #tpu.pipeline_mode<synchronous>, transform_indices = @transform_2, window_bounds = array<i64: 4, 512>}, {transform_indices = @transform_3, window_bounds = array<i64: 4, 512>}]} {
    %c0 = arith.constant 0 : index
    %c0_0 = arith.constant 0 : index
    %0 = vector.load %arg1[%c0, %c0_0] : memref<4x512xf32, #tpu.memory_space<vmem>>, vector<4x512xf32>
    %cst = arith.constant dense<0.000000e+00> : vector<4xf32>
    %1 = vector.multi_reduction <add>, %0, %cst [1] : vector<4x512xf32> to vector<4xf32>
    %2 = vector.shape_cast %1 : vector<4xf32> to vector<4x1xf32>
    %3 = arith.mulf %0, %0 : vector<4x512xf32>
    %cst_1 = arith.constant dense<0.000000e+00> : vector<4xf32>
    %4 = vector.multi_reduction <add>, %3, %cst_1 [1] : vector<4x512xf32> to vector<4xf32>
    %5 = vector.shape_cast %4 : vector<4xf32> to vector<4x1xf32>
    %cst_2 = arith.constant 0.001953125 : f32
    %6 = vector.broadcast %cst_2 : f32 to vector<4x1xf32>
    %7 = arith.mulf %2, %6 : vector<4x1xf32>
    %cst_3 = arith.constant 0.001953125 : f32
    %8 = vector.broadcast %cst_3 : f32 to vector<4x1xf32>
    %9 = arith.mulf %5, %8 : vector<4x1xf32>
    %10 = arith.mulf %7, %7 : vector<4x1xf32>
    %11 = arith.subf %9, %10 : vector<4x1xf32>
    %cst_4 = arith.constant 0.000000e+00 : f32
    %12 = vector.broadcast %cst_4 : f32 to vector<4x1xf32>
    %13 = arith.maximumf %11, %12 : vector<4x1xf32>
    %cst_5 = arith.constant 9.99999974E-6 : f32
    %14 = vector.broadcast %cst_5 : f32 to vector<4x1xf32>
    %15 = arith.addf %13, %14 : vector<4x1xf32>
    %16 = math.rsqrt %15 : vector<4x1xf32>
    %17 = vector.broadcast %7 : vector<4x1xf32> to vector<4x512xf32>
    %18 = arith.subf %0, %17 : vector<4x512xf32>
    %19 = vector.broadcast %16 : vector<4x1xf32> to vector<4x512xf32>
    %20 = arith.mulf %18, %19 : vector<4x512xf32>
    %c0_6 = arith.constant 0 : index
    %c0_7 = arith.constant 0 : index
    %21 = vector.load %arg2[%c0_6, %c0_7] : memref<4x512xf32, #tpu.memory_space<vmem>>, vector<4x512xf32>
    %22 = arith.mulf %20, %21 : vector<4x512xf32>
    %c0_8 = arith.constant 0 : index
    %c0_9 = arith.constant 0 : index
    %23 = vector.load %arg3[%c0_8, %c0_9] : memref<4x512xf32, #tpu.memory_space<vmem>>, vector<4x512xf32>
    %24 = arith.addf %22, %23 : vector<4x512xf32>
    %c0_10 = arith.constant 0 : index
    %c0_11 = arith.constant 0 : index
    %25 = vector.load %arg4[%c0_10, %c0_11] : memref<4x512xf32, #tpu.memory_space<vmem>>, vector<4x512xf32>
    tpu.vector_store %arg4[%c0_10, %c0_11], %24 {strides = array<i32>} : memref<4x512xf32, #tpu.memory_space<vmem>>, vector<4x512xf32>,
    return
  }
  func.func @transform_0(%arg0: i32) -> (i32, i32) {
    %c0_i32 = arith.constant 0 : i32
    %c0_i32_0 = arith.constant 0 : i32
    return %arg0, %c0_i32 : i32, i32
  }
  func.func @transform_1(%arg0: i32) -> (i32, i32) {
    %c0_i32 = arith.constant 0 : i32
    %c0_i32_0 = arith.constant 0 : i32
    %c0_i32_1 = arith.constant 0 : i32
    return %c0_i32, %c0_i32_0 : i32, i32
  }
  func.func @transform_2(%arg0: i32) -> (i32, i32) {
    %c0_i32 = arith.constant 0 : i32
    %c0_i32_0 = arith.constant 0 : i32
    %c0_i32_1 = arith.constant 0 : i32
    return %c0_i32, %c0_i32_0 : i32, i32
  }
  func.func @transform_3(%arg0: i32) -> (i32, i32) {
    %c0_i32 = arith.constant 0 : i32
    %c0_i32_0 = arith.constant 0 : i32
    return %arg0, %c0_i32 : i32, i32
  }
}

</mosaic_0001>

<llo_original>
// kernel: tpu_custom_call.1
$region0: #{tpu_custom_call.1}
  #allocation0 [shape = 'u32[]', space=smem, size = 0x4, offset = 0x4, fixed_abs, tag = 'smem constant byte address 0x4 - core index']
  #allocation1 [shape = 'u32[144,128]{1,0:T(1,128)}', space=vmem, size = 0x12000, scoped, tag = 'internal scratch']
  %s0 = inlined_call_operand.hbm [shape: f32[4,512], index: 0, kind: input, shape index: {}]
  %s1 = inlined_call_operand.hbm [shape: f32[4,512], index: 1, kind: input, shape index: {}]
  %s2 = inlined_call_operand.hbm [shape: f32[4,512], index: 2, kind: input, shape index: {}]
  %s3 = inlined_call_operand.hbm [shape: f32[4,512], index: 3, kind: output, shape index: {}]
  %s4 = sld [smem:[#allocation0]]
  $region34: #{tpu_custom_call.1} parent=0
    _
  %s6 = ssub.s32 1, %s4
  %s7 = scalar_select 0, %s6, %s4
  $region1: #{tpu_custom_call.1} parent=0
    #allocation2 [shape = 'u8[8192]{0}', space=vmem, size = 0x2000, scoped, tag = 'input window, operand 0, single buffered']
    #allocation3 [shape = 's32[1]{0}', space=sflag, size = 0x4, scoped, tag = 'scoped memory for tpu_custom_call.1']
    #allocation4 [shape = 's32[1]{0}', space=sflag, size = 0x4, scoped, tag = 'scoped memory for tpu_custom_call.1']
    #allocation5 [shape = 'u8[8192]{0}', space=vmem, size = 0x2000, scoped, tag = 'input window, operand 1, single buffered']
    #allocation6 [shape = 's32[1]{0}', space=sflag, size = 0x4, scoped, tag = 'scoped memory for tpu_custom_call.1']
    #allocation7 [shape = 'u8[8192]{0}', space=vmem, size = 0x2000, scoped, tag = 'input window, operand 2, single buffered']
    #allocation8 [shape = 'u8[8192]{0}', space=vmem, size = 0x2000, scoped, tag = 'output window, operand 0, single buffered']
    %8 = vsyncpa [#allocation3], 0
    %9 = vsyncpa [#allocation6], 0
    %10 = vsyncpa [#allocation4], 0
    // Predicated region
    $region2: #{tpu_custom_call.1} parent=1 // pred_check
      _
    $region3: #{tpu_custom_call.1} parent=1 // pred_check_branch
      %12 = sbr.rel (0) target = $region5
    $region4: #{tpu_custom_call.1} parent=1 // pred_region
      %s14 = ssub.s32 256, 256
      %15 = vsyncadd [#allocation3], %s14
      %s17 = sshll.u32 [#allocation2], 4
      %s18 = int_to_ptr.vmem [resolvable:$true] %s17
      %20 = dma.hbm_to_vmem [thread:$0]  %s0, 256, %s18, [#allocation3]
    $region5: #{tpu_custom_call.1} parent=1 // pred_fallthru
      _
    // Predicated region
    $region6: #{tpu_custom_call.1} parent=1 // pred_check
      _
    $region7: #{tpu_custom_call.1} parent=1 // pred_check_branch
      %22 = sbr.rel (0) target = $region9
    $region8: #{tpu_custom_call.1} parent=1 // pred_region
      %s24 = ssub.s32 256, 256
      %25 = vsyncadd [#allocation6], %s24
      %s27 = sshll.u32 [#allocation5], 4
      %s28 = int_to_ptr.vmem [resolvable:$true] %s27
      %30 = dma.hbm_to_vmem [thread:$0]  %s1, 256, %s28, [#allocation6]
    $region9: #{tpu_custom_call.1} parent=1 // pred_fallthru
      _
    // Predicated region
    $region10: #{tpu_custom_call.1} parent=1 // pred_check
      _
    $region11: #{tpu_custom_call.1} parent=1 // pred_check_branch
      %32 = sbr.rel (0) target = $region13
    $region12: #{tpu_custom_call.1} parent=1 // pred_region
      %s34 = ssub.s32 256, 256
      %35 = vsyncadd [#allocation6], %s34
      %s37 = sshll.u32 [#allocation7], 4
      %s38 = int_to_ptr.vmem [resolvable:$true] %s37
      %40 = dma.hbm_to_vmem [thread:$0]  %s2, 256, %s38, [#allocation6]
    $region13: #{tpu_custom_call.1} parent=1 // pred_fallthru
      _
    // Predicated region
    $region14: #{tpu_custom_call.1} parent=1 // pred_check
      _
    $region15: #{tpu_custom_call.1} parent=1 // pred_check_branch
      %42 = sbr.rel (0) target = $region17
    $region16: #{tpu_custom_call.1} parent=1 // pred_region
      %43 = dma.done [#allocation3], 256
    $region17: #{tpu_custom_call.1} parent=1 // pred_fallthru
      _
    // Predicated region
    $region18: #{tpu_custom_call.1} parent=1 // pred_check
      _
    $region19: #{tpu_custom_call.1} parent=1 // pred_check_branch
      %45 = sbr.rel (0) target = $region21
    $region20: #{tpu_custom_call.1} parent=1 // pred_region
      %46 = dma.done [#allocation6], 256
    $region21: #{tpu_custom_call.1} parent=1 // pred_fallthru
      _
    // Predicated region
    $region22: #{tpu_custom_call.1} parent=1 // pred_check
      _
    $region23: #{tpu_custom_call.1} parent=1 // pred_check_branch
      %48 = sbr.rel (0) target = $region25
    $region24: #{tpu_custom_call.1} parent=1 // pred_region
      %49 = dma.done [#allocation6], 256
    $region25: #{tpu_custom_call.1} parent=1 // pred_fallthru
      _
    %v50 = vld [vmem:[#allocation2] sm:$0xff]
    %v51 = vld [vmem:[#allocation2 + $0x8] sm:$0xff]
    %v54 = vcombine.high %v50, %v50
    %v55 = vcombine.high %v51, %v51
    %vm58 = vcmask 1043456
    %v59 = vsel %vm58, %v50, 0.0
    %v60 = vsel %vm58, %v54, 0.0
    %v61 = vadd.f32 %v59, %v60
    %v62 = vsel %vm58, %v51, 0.0
    %v63 = vadd.f32 %v61, %v62
    %v64 = vsel %vm58, %v55, 0.0
    %v65 = vadd.f32 %v63, %v64
    %66 = vadd.xlane.f32.xlu0 %v65
    %v67 = vpop.xlane.xlu0 %66
    %v68 = vmul.f32 %v50, %v50
    %v69 = vmul.f32 %v51, %v51
    %v72 = vcombine.high %v68, %v68
    %v73 = vcombine.high %v69, %v69
    %v76 = vsel %vm58, %v68, 0.0
    %v77 = vsel %vm58, %v72, 0.0
    %v78 = vadd.f32 %v76, %v77
    %v79 = vsel %vm58, %v69, 0.0
    %v80 = vadd.f32 %v78, %v79
    %v81 = vsel %vm58, %v73, 0.0
    %v82 = vadd.f32 %v80, %v81
    %83 = vadd.xlane.f32.xlu0 %v82
    %v84 = vpop.xlane.xlu0 %83
    %v85 = vmul.f32 %v67, 0.001953125
    %v86 = vmul.f32 %v84, 0.001953125
    %v87 = vmul.f32 %v85, %v85
    %v88 = vsub.f32 %v86, %v87
    %v89 = vmax.f32 %v88, 0.0
    %v90 = vadd.f32 %v89, 1e-05
    %v91 = vrsqrt.pop %v90
    %v94 = vunpack.c.l.s4 839922192
    %v95 = vunpack.c.0.s8 %v94
    %v96 = vlaneseq
    %v97 = vshrl.u32 %v96, 7
    %v98 = vsub.s32 %v95, %v97
    %v99 = vrot.slane %v85, %v98
    %v101 = vsub.f32 %v50, %v99
    %v102 = vsub.f32 %v51, %v99
    %v105 = vunpack.c.l.s4 839922192
    %v106 = vunpack.c.0.s8 %v105
    %v107 = vlaneseq
    %v108 = vshrl.u32 %v107, 7
    %v109 = vsub.s32 %v106, %v108
    %v110 = vrot.slane %v91, %v109
    %v112 = vmul.f32 %v101, %v110
    %v113 = vmul.f32 %v102, %v110
    %v114 = vld [vmem:[#allocation5] sm:$0xff]
    %v115 = vld [vmem:[#allocation5 + $0x8] sm:$0xff]
    %v116 = vmul.f32 %v112, %v114
    %v117 = vmul.f32 %v113, %v115
    %v118 = vld [vmem:[#allocation7] sm:$0xff]
    %v119 = vld [vmem:[#allocation7 + $0x8] sm:$0xff]
    %v120 = vadd.f32 %v116, %v118
    %v121 = vadd.f32 %v117, %v119
    %122 = vst [vmem:[#allocation8] sm:$0xff] %v120
    %123 = vst [vmem:[#allocation8 + $0x8] sm:$0xff] %v121
    // Predicated region
    $region26: #{tpu_custom_call.1} parent=1 // pred_check
      _
    $region27: #{tpu_custom_call.1} parent=1 // pred_check_branch
      %125 = sbr.rel (0) target = $region29
    $region28: #{tpu_custom_call.1} parent=1 // pred_region
      %s127 = ssub.s32 256, 256
      %128 = vsyncadd [#allocation4], %s127
      %s130 = sshll.u32 [#allocation8], 4
      %s131 = int_to_ptr.vmem [resolvable:$true] %s130
      %133 = dma.vmem_to_hbm [thread:$0]  %s131, 256, %s3, [#allocation4]
    $region29: #{tpu_custom_call.1} parent=1 // pred_fallthru
      _
    // Predicated region
    $region30: #{tpu_custom_call.1} parent=1 // pred_check
      _
    $region31: #{tpu_custom_call.1} parent=1 // pred_check_branch
      %135 = sbr.rel (0) target = $region33
    $region32: #{tpu_custom_call.1} parent=1 // pred_region
      %136 = dma.done [#allocation4], 256
    $region33: #{tpu_custom_call.1} parent=1 // pred_fallthru
      _
    %137 = vsyncpa [#allocation3], 1
    %138 = vsyncpa [#allocation6], 1
    %139 = vsyncpa [#allocation4], 1

</llo_original>
